<compile_context>
chip_gen: v7x
topology: tpu7x:2x2x1
jax: 0.10.0
libtpu: 0.0.40
codegen_flags: <defaults>
</compile_context>

<pallas_src>
import jax
import jax.numpy as jnp
from jax.experimental import pallas as pl
from jax.experimental.pallas import tpu as pltpu

GROUP = 8  # batch rows packed per 128-lane row (matches sublane count)


def _mlp_kernel(x_ref,
                w1_ref, b1_ref,
                w2_ref, b2_ref,
                w3_ref, b3_ref,
                w4_ref, b4_ref,
                o_ref):
    """Lane-packed MLP: x_ref (rows, G*in) -> o_ref (rows, G*out).

    Weights are block-diagonal kron(I_G, W^T), so one lane-dense matmul per
    layer applies the original Linear independently to each packed batch row.
    """
    compute_dtype = x_ref.dtype
    h = x_ref[...]
    layers = ((w1_ref, b1_ref, True),
              (w2_ref, b2_ref, True),
              (w3_ref, b3_ref, True),
              (w4_ref, b4_ref, False))
    for w_ref, b_ref, relu in layers:
        # MXU matmul with f32 accumulation; bias add + ReLU in f32 (VPU).
        z = jnp.dot(h, w_ref[...], preferred_element_type=jnp.float32)
        z = z + b_ref[...].astype(jnp.float32)          # (1, G*n) broadcast
        if relu:
            z = jnp.maximum(z, 0.0)
            h = z.astype(compute_dtype)                  # bf16 between layers if bf16 in
        else:
            h = z
    o_ref[...] = h.astype(o_ref.dtype)


def init_embedding_params(key, in_features, out_features, layer_size=(8, 16, 32),
                          dtype=jnp.float32):
    """PyTorch-style Linear init; weights stored PyTorch-native as (out_dim, in_dim)."""
    dims = [in_features] + list(layer_size) + [out_features]
    params = []
    for i in range(1, len(dims)):
        fan_in, fan_out = dims[i - 1], dims[i]
        key, kw, kb = jax.random.split(key, 3)
        bound = 1.0 / (fan_in ** 0.5)
        w = jax.random.uniform(kw, (fan_out, fan_in), dtype, -bound, bound)
        b = jax.random.uniform(kb, (fan_out,), dtype, -bound, bound)
        params.append((w, b))
    return params


def pack_embedding_params(params, group=GROUP):
    """Expand each (W (out,in), b (out,)) into (kron(I_g, W^T), tile(b, g)).

    These are tiny one-time arrays (<0.5 MiB total); under jit they constant
    fold / get hoisted out of the per-step graph.
    """
    packed = []
    for w, b in params:
        eye = jnp.eye(group, dtype=w.dtype)
        w_bd = jnp.kron(eye, w.T)                               # (g*in, g*out) block-diag
        b_t = jnp.tile(b.reshape(-1), group).reshape(1, -1)     # (1, g*out)
        packed.append((w_bd, b_t))
    return packed


def _round_up(n, m):
    return ((n + m - 1) // m) * m


def embedding_forward(x, params, *, tile_rows=None):
    """x: (batch, in_features) -> (batch, out_features); matches the PyTorch module."""
    batch, in_features = x.shape
    out_features = params[-1][0].shape[0]
    dtype = x.dtype
    g = GROUP

    # Packed-row tile: multiple of 16 sublanes (covers f32 and bf16 tiling).
    if tile_rows is None:
        tile_rows = min(1024, _round_up(pl.cdiv(batch, g), 16))
    assert tile_rows % 16 == 0, "tile_rows must be a multiple of 16"
    tile_b = g * tile_rows
    padded = _round_up(batch, tile_b)

    # Wrapper-side layout: pad (zeros are harmless, sliced off), then a
    # row-major reshape that packs GROUP batch rows per lane-row. The reshape
    # is layout-compatible -> a free bitcast, no extra HBM pass.
    xp = x if padded == batch else jnp.pad(x, ((0, padded - batch), (0, 0)))
    x_packed = xp.reshape(padded // g, g * in_features)

    packed_params = pack_embedding_params(params, g)

    flat_args = [x_packed]
    in_specs = [pl.BlockSpec((tile_rows, g * in_features), lambda i: (i, 0))]
    for w_bd, b_t in packed_params:
        flat_args.extend([w_bd, b_t])
        # Whole (tiny) weight/bias arrays with a constant block index:
        # DMA'd once, resident in VMEM across the entire grid.
        in_specs.append(pl.BlockSpec(w_bd.shape, lambda i: (0, 0)))
        in_specs.append(pl.BlockSpec(b_t.shape, lambda i: (0, 0)))

    grid = (padded // tile_b,)
    out_packed = pl.pallas_call(
        _mlp_kernel,
        out_shape=jax.ShapeDtypeStruct((padded // g, g * out_features), dtype),
        grid_spec=pltpu.PrefetchScalarGridSpec(
            num_scalar_prefetch=0,
            grid=grid,
            in_specs=in_specs,
            out_specs=pl.BlockSpec((tile_rows, g * out_features), lambda i: (i, 0)),
        ),
        compiler_params=pltpu.CompilerParams(
            dimension_semantics=("parallel",)),
    )(*flat_args)

    # Free reshape back to batch-major, drop padding.
    return out_packed.reshape(padded, out_features)[:batch]


def _reference_forward(x, params):
    h = x.astype(jnp.float32)
    n = len(params)
    for i, (w, b) in enumerate(params):
        h = h @ w.astype(jnp.float32).T + b.astype(jnp.float32).reshape(1, -1)
        if i < n - 1:
            h = jnp.maximum(h, 0.0)
    return h


if __name__ == "__main__":
    in_features = 16
    out_features = 32

    key = jax.random.PRNGKey(0)
    k_param, k_x1, k_x2 = jax.random.split(key, 3)

    params = init_embedding_params(k_param, in_features, out_features,
                                   dtype=jnp.float32)

    # --- f32, small batch (single grid step; batch padded to one packed tile)
    x = jax.random.normal(k_x1, (8, in_features), jnp.float32)
    out = jax.block_until_ready(embedding_forward(x, params))
    ref = _reference_forward(x, params)
    assert out.shape == (8, out_features)
    assert jnp.allclose(out, ref, atol=1e-4, rtol=1e-4), "f32 mismatch vs reference"

    # --- f32, ragged batch across several grid steps (exercises padding + pipeline)
    x2 = jax.random.normal(k_x2, (300, in_features), jnp.float32)
    out2 = jax.block_until_ready(embedding_forward(x2, params, tile_rows=16))
    ref2 = _reference_forward(x2, params)
    assert out2.shape == (300, out_features)
    assert jnp.allclose(out2, ref2, atol=1e-4, rtol=1e-4), "tiled f32 mismatch"

    # --- bf16 HBM traffic, f32 accumulation inside the kernel
    params_bf16 = [(w.astype(jnp.bfloat16), b.astype(jnp.bfloat16)) for w, b in params]
    x_bf16 = x.astype(jnp.bfloat16)
    out_bf16 = jax.block_until_ready(embedding_forward(x_bf16, params_bf16))
    ref_bf16 = _reference_forward(x_bf16, params_bf16)
    assert out_bf16.shape == (8, out_features)
    assert jnp.allclose(out_bf16.astype(jnp.float32), ref_bf16,
                        atol=1e-1, rtol=1e-1), "bf16 mismatch vs reference"

    print("KERNEL_OK")
</pallas_src>

<mosaic_0001>
module attributes {stable_mosaic.version = 11 : i64} {
  func.func @_mlp_kernel(%arg0: i32, %arg1: memref<16x128xf32, #tpu.memory_space<vmem>>, %arg2: memref<128x64xf32, #tpu.memory_space<vmem>>, %arg3: memref<1x64xf32, #tpu.memory_space<vmem>>, %arg4: memref<64x128xf32, #tpu.memory_space<vmem>>, %arg5: memref<1x128xf32, #tpu.memory_space<vmem>>, %arg6: memref<128x256xf32, #tpu.memory_space<vmem>>, %arg7: memref<1x256xf32, #tpu.memory_space<vmem>>, %arg8: memref<256x256xf32, #tpu.memory_space<vmem>>, %arg9: memref<1x256xf32, #tpu.memory_space<vmem>>, %arg10: memref<16x256xf32, #tpu.memory_space<vmem>>) attributes {dimension_semantics = [#tpu.dimension_semantics<parallel>], iteration_bounds = array<i64: 1>, scalar_prefetch = 0 : i64, scratch_operands = 0 : i64, tpu.core_type = #tpu.core_type<tc>, window_params = [{transform_indices = @transform_0, window_bounds = array<i64: 16, 128>}, {pipeline_mode = #tpu.pipeline_mode<synchronous>, transform_indices = @transform_1, window_bounds = array<i64: 128, 64>}, {pipeline_mode = #tpu.pipeline_mode<synchronous>, transform_indices = @transform_2, window_bounds = array<i64: 1, 64>}, {pipeline_mode = #tpu.pipeline_mode<synchronous>, transform_indices = @transform_3, window_bounds = array<i64: 64, 128>}, {pipeline_mode = #tpu.pipeline_mode<synchronous>, transform_indices = @transform_4, window_bounds = array<i64: 1, 128>}, {pipeline_mode = #tpu.pipeline_mode<synchronous>, transform_indices = @transform_5, window_bounds = array<i64: 128, 256>}, {pipeline_mode = #tpu.pipeline_mode<synchronous>, transform_indices = @transform_6, window_bounds = array<i64: 1, 256>}, {pipeline_mode = #tpu.pipeline_mode<synchronous>, transform_indices = @transform_7, window_bounds = array<i64: 256, 256>}, {pipeline_mode = #tpu.pipeline_mode<synchronous>, transform_indices = @transform_8, window_bounds = array<i64: 1, 256>}, {transform_indices = @transform_9, window_bounds = array<i64: 16, 256>}]} {
    %c0 = arith.constant 0 : index
    %c0_0 = arith.constant 0 : index
    %0 = vector.load %arg1[%c0, %c0_0] : memref<16x128xf32, #tpu.memory_space<vmem>>, vector<16x128xf32>
    %c0_1 = arith.constant 0 : index
    %c0_2 = arith.constant 0 : index
    %1 = vector.load %arg2[%c0_1, %c0_2] : memref<128x64xf32, #tpu.memory_space<vmem>>, vector<128x64xf32>
    %cst = arith.constant dense<0.000000e+00> : vector<16x64xf32>
    %2 = tpu.matmul %0, %1, %cst {dimension_numbers = #tpu.dot_dimension_numbers<[1], [0], [0], [1], [0, 0, 1, 1], [], []>} : vector<16x128xf32>, vector<128x64xf32>, vector<16x64xf32> -> vector<16x64xf32>
    %c0_3 = arith.constant 0 : index
    %c0_4 = arith.constant 0 : index
    %3 = vector.load %arg3[%c0_3, %c0_4] : memref<1x64xf32, #tpu.memory_space<vmem>>, vector<1x64xf32>
    %4 = vector.broadcast %3 : vector<1x64xf32> to vector<16x64xf32>
    %5 = arith.addf %2, %4 : vector<16x64xf32>
    %cst_5 = arith.constant 0.000000e+00 : f32
    %6 = vector.broadcast %cst_5 : f32 to vector<16x64xf32>
    %7 = arith.maximumf %5, %6 : vector<16x64xf32>
    %c0_6 = arith.constant 0 : index
    %c0_7 = arith.constant 0 : index
    %8 = vector.load %arg4[%c0_6, %c0_7] : memref<64x128xf32, #tpu.memory_space<vmem>>, vector<64x128xf32>
    %cst_8 = arith.constant dense<0.000000e+00> : vector<16x128xf32>
    %9 = tpu.matmul %7, %8, %cst_8 {dimension_numbers = #tpu.dot_dimension_numbers<[1], [0], [0], [1], [0, 0, 1, 1], [], []>} : vector<16x64xf32>, vector<64x128xf32>, vector<16x128xf32> -> vector<16x128xf32>
    %c0_9 = arith.constant 0 : index
    %c0_10 = arith.constant 0 : index
    %10 = vector.load %arg5[%c0_9, %c0_10] : memref<1x128xf32, #tpu.memory_space<vmem>>, vector<1x128xf32>
    %11 = vector.broadcast %10 : vector<1x128xf32> to vector<16x128xf32>
    %12 = arith.addf %9, %11 : vector<16x128xf32>
    %cst_11 = arith.constant 0.000000e+00 : f32
    %13 = vector.broadcast %cst_11 : f32 to vector<16x128xf32>
    %14 = arith.maximumf %12, %13 : vector<16x128xf32>
    %c0_12 = arith.constant 0 : index
    %c0_13 = arith.constant 0 : index
    %15 = vector.load %arg6[%c0_12, %c0_13] : memref<128x256xf32, #tpu.memory_space<vmem>>, vector<128x256xf32>
    %cst_14 = arith.constant dense<0.000000e+00> : vector<16x256xf32>
    %16 = tpu.matmul %14, %15, %cst_14 {dimension_numbers = #tpu.dot_dimension_numbers<[1], [0], [0], [1], [0, 0, 1, 1], [], []>} : vector<16x128xf32>, vector<128x256xf32>, vector<16x256xf32> -> vector<16x256xf32>
    %c0_15 = arith.constant 0 : index
    %c0_16 = arith.constant 0 : index
    %17 = vector.load %arg7[%c0_15, %c0_16] : memref<1x256xf32, #tpu.memory_space<vmem>>, vector<1x256xf32>
    %18 = vector.broadcast %17 : vector<1x256xf32> to vector<16x256xf32>
    %19 = arith.addf %16, %18 : vector<16x256xf32>
    %cst_17 = arith.constant 0.000000e+00 : f32
    %20 = vector.broadcast %cst_17 : f32 to vector<16x256xf32>
    %21 = arith.maximumf %19, %20 : vector<16x256xf32>
    %c0_18 = arith.constant 0 : index
    %c0_19 = arith.constant 0 : index
    %22 = vector.load %arg8[%c0_18, %c0_19] : memref<256x256xf32, #tpu.memory_space<vmem>>, vector<256x256xf32>
    %cst_20 = arith.constant dense<0.000000e+00> : vector<16x256xf32>
    %23 = tpu.matmul %21, %22, %cst_20 {dimension_numbers = #tpu.dot_dimension_numbers<[1], [0], [0], [1], [0, 0, 1, 1], [], []>} : vector<16x256xf32>, vector<256x256xf32>, vector<16x256xf32> -> vector<16x256xf32>
    %c0_21 = arith.constant 0 : index
    %c0_22 = arith.constant 0 : index
    %24 = vector.load %arg9[%c0_21, %c0_22] : memref<1x256xf32, #tpu.memory_space<vmem>>, vector<1x256xf32>
    %25 = vector.broadcast %24 : vector<1x256xf32> to vector<16x256xf32>
    %26 = arith.addf %23, %25 : vector<16x256xf32>
    %c0_23 = arith.constant 0 : index
    %c0_24 = arith.constant 0 : index
    %27 = vector.load %arg10[%c0_23, %c0_24] : memref<16x256xf32, #tpu.memory_space<vmem>>, vector<16x256xf32>
    tpu.vector_store %arg10[%c0_23, %c0_24], %26 {strides = array<i32>} : memref<16x256xf32, #tpu.memory_space<vmem>>, vector<16x256xf32>,
    return
  }
  func.func @transform_0(%arg0: i32) -> (i32, i32) {
    %c0_i32 = arith.constant 0 : i32
    %c0_i32_0 = arith.constant 0 : i32
    return %arg0, %c0_i32 : i32, i32
  }
  func.func @transform_1(%arg0: i32) -> (i32, i32) {
    %c0_i32 = arith.constant 0 : i32
    %c0_i32_0 = arith.constant 0 : i32
    %c0_i32_1 = arith.constant 0 : i32
    return %c0_i32, %c0_i32_0 : i32, i32
  }
  func.func @transform_2(%arg0: i32) -> (i32, i32) {
    %c0_i32 = arith.constant 0 : i32
    %c0_i32_0 = arith.constant 0 : i32
    %c0_i32_1 = arith.constant 0 : i32
    return %c0_i32, %c0_i32_0 : i32, i32
  }
  func.func @transform_3(%arg0: i32) -> (i32, i32) {
    %c0_i32 = arith.constant 0 : i32
    %c0_i32_0 = arith.constant 0 : i32
    %c0_i32_1 = arith.constant 0 : i32
    return %c0_i32, %c0_i32_0 : i32, i32
  }
  func.func @transform_4(%arg0: i32) -> (i32, i32) {
    %c0_i32 = arith.constant 0 : i32
    %c0_i32_0 = arith.constant 0 : i32
    %c0_i32_1 = arith.constant 0 : i32
    return %c0_i32, %c0_i32_0 : i32, i32
  }
  func.func @transform_5(%arg0: i32) -> (i32, i32) {
    %c0_i32 = arith.constant 0 : i32
    %c0_i32_0 = arith.constant 0 : i32
    %c0_i32_1 = arith.constant 0 : i32
    return %c0_i32, %c0_i32_0 : i32, i32
  }
  func.func @transform_6(%arg0: i32) -> (i32, i32) {
    %c0_i32 = arith.constant 0 : i32
    %c0_i32_0 = arith.constant 0 : i32
    %c0_i32_1 = arith.constant 0 : i32
    return %c0_i32, %c0_i32_0 : i32, i32
  }
  func.func @transform_7(%arg0: i32) -> (i32, i32) {
    %c0_i32 = arith.constant 0 : i32
    %c0_i32_0 = arith.constant 0 : i32
    %c0_i32_1 = arith.constant 0 : i32
    return %c0_i32, %c0_i32_0 : i32, i32
  }
  func.func @transform_8(%arg0: i32) -> (i32, i32) {
    %c0_i32 = arith.constant 0 : i32
    %c0_i32_0 = arith.constant 0 : i32
    %c0_i32_1 = arith.constant 0 : i32
    return %c0_i32, %c0_i32_0 : i32, i32
  }
  func.func @transform_9(%arg0: i32) -> (i32, i32) {
    %c0_i32 = arith.constant 0 : i32
    %c0_i32_0 = arith.constant 0 : i32
    return %arg0, %c0_i32 : i32, i32
  }
}

</mosaic_0001>

<llo_original>
// kernel: tpu_custom_call.1
$region0: #{tpu_custom_call.1}
  #allocation0 [shape = 'u32[]', space=smem, size = 0x4, offset = 0x4, fixed_abs, tag = 'smem constant byte address 0x4 - core index']
  #allocation1 [shape = 'u32[144,128]{1,0:T(1,128)}', space=vmem, size = 0x12000, scoped, tag = 'internal scratch']
  %s0 = inlined_call_operand.vmem [shape: f32[16,128], index: 0, kind: input, shape index: {}]
  %s1 = inlined_call_operand.vmem [shape: f32[128,64], index: 1, kind: input, shape index: {}]
  %s2 = inlined_call_operand.vmem [shape: f32[1,64], index: 2, kind: input, shape index: {}]
  %s3 = inlined_call_operand.vmem [shape: f32[64,128], index: 3, kind: input, shape index: {}]
  %s4 = inlined_call_operand.vmem [shape: f32[1,128], index: 4, kind: input, shape index: {}]
  %s5 = inlined_call_operand.hbm [shape: f32[128,256], index: 5, kind: input, shape index: {}]
  %s6 = inlined_call_operand.vmem [shape: f32[1,256], index: 6, kind: input, shape index: {}]
  %s7 = inlined_call_operand.hbm [shape: f32[256,256], index: 7, kind: input, shape index: {}]
  %s8 = inlined_call_operand.vmem [shape: f32[1,256], index: 8, kind: input, shape index: {}]
  %s9 = inlined_call_operand.hbm [shape: f32[16,256], index: 9, kind: output, shape index: {}]
  %s10 = sld [smem:[#allocation0]]
  $region54: #{tpu_custom_call.1} parent=0
    _
  %s12 = ssub.s32 1, %s10
  %s13 = scalar_select 0, %s12, %s10
  $region1: #{tpu_custom_call.1} parent=0
    #allocation2 [shape = 'u8[131072]{0}', space=vmem, size = 0x20000, scoped, tag = 'input window, operand 5, single buffered']
    #allocation3 [shape = 's32[1]{0}', space=sflag, size = 0x4, scoped, tag = 'scoped memory for tpu_custom_call.1']
    #allocation4 [shape = 's32[1]{0}', space=sflag, size = 0x4, scoped, tag = 'scoped memory for tpu_custom_call.1']
    #allocation5 [shape = 'u8[262144]{0}', space=vmem, size = 0x40000, scoped, tag = 'input window, operand 7, single buffered']
    #allocation6 [shape = 's32[1]{0}', space=sflag, size = 0x4, scoped, tag = 'scoped memory for tpu_custom_call.1']
    #allocation7 [shape = 'u8[16384]{0}', space=vmem, size = 0x4000, scoped, tag = 'output window, operand 0, single buffered']
    %14 = vsyncpa [#allocation3], 0
    %15 = vsyncpa [#allocation6], 0
    %16 = vsyncpa [#allocation4], 0
    // Predicated region
    $region2: #{tpu_custom_call.1} parent=1 // pred_check
      _
    $region3: #{tpu_custom_call.1} parent=1 // pred_check_branch
      %18 = sbr.rel (0) target = $region5
    $region4: #{tpu_custom_call.1} parent=1 // pred_region
      _
    $region5: #{tpu_custom_call.1} parent=1 // pred_fallthru
      _
    // Predicated region
    $region6: #{tpu_custom_call.1} parent=1 // pred_check
      _
    $region7: #{tpu_custom_call.1} parent=1 // pred_check_branch
      %20 = sbr.rel (0) target = $region9
    $region8: #{tpu_custom_call.1} parent=1 // pred_region
      _
    $region9: #{tpu_custom_call.1} parent=1 // pred_fallthru
      _
    // Predicated region
    $region10: #{tpu_custom_call.1} parent=1 // pred_check
      _
    $region11: #{tpu_custom_call.1} parent=1 // pred_check_branch
      %22 = sbr.rel (0) target = $region13
    $region12: #{tpu_custom_call.1} parent=1 // pred_region
      _
    $region13: #{tpu_custom_call.1} parent=1 // pred_fallthru
      _
    // Predicated region
    $region14: #{tpu_custom_call.1} parent=1 // pred_check
      _
    $region15: #{tpu_custom_call.1} parent=1 // pred_check_branch
      %24 = sbr.rel (0) target = $region17
    $region16: #{tpu_custom_call.1} parent=1 // pred_region
      _
    $region17: #{tpu_custom_call.1} parent=1 // pred_fallthru
      _
    // Predicated region
    $region18: #{tpu_custom_call.1} parent=1 // pred_check
      _
    $region19: #{tpu_custom_call.1} parent=1 // pred_check_branch
      %26 = sbr.rel (0) target = $region21
    $region20: #{tpu_custom_call.1} parent=1 // pred_region
      _
    $region21: #{tpu_custom_call.1} parent=1 // pred_fallthru
      _
    // Predicated region
    $region22: #{tpu_custom_call.1} parent=1 // pred_check
      _
    $region23: #{tpu_custom_call.1} parent=1 // pred_check_branch
      %28 = sbr.rel (0) target = $region25
    $region24: #{tpu_custom_call.1} parent=1 // pred_region
      %s30 = ssub.s32 4096, 4096
      %31 = vsyncadd [#allocation3], %s30
      %s32 = sshll.u32 [#allocation2], 4
      %s33 = int_to_ptr.vmem [resolvable:$true] %s32
      %38 = dma.hbm_to_vmem [thread:$0]  %s5, 4096, %s33, [#allocation3], 256, 256, 16
    $region25: #{tpu_custom_call.1} parent=1 // pred_fallthru
      _
    // Predicated region
    $region26: #{tpu_custom_call.1} parent=1 // pred_check
      _
    $region27: #{tpu_custom_call.1} parent=1 // pred_check_branch
      %40 = sbr.rel (0) target = $region29
    $region28: #{tpu_custom_call.1} parent=1 // pred_region
      _
    $region29: #{tpu_custom_call.1} parent=1 // pred_fallthru
      _
    // Predicated region
    $region30: #{tpu_custom_call.1} parent=1 // pred_check
      _
    $region31: #{tpu_custom_call.1} parent=1 // pred_check_branch
      %42 = sbr.rel (0) target = $region33
    $region32: #{tpu_custom_call.1} parent=1 // pred_region
      %s44 = ssub.s32 8192, 8192
      %45 = vsyncadd [#allocation6], %s44
      %s46 = sshll.u32 [#allocation5], 4
      %s47 = int_to_ptr.vmem [resolvable:$true] %s46
      %52 = dma.hbm_to_vmem [thread:$0]  %s7, 8192, %s47, [#allocation6], 256, 256, 16
    $region33: #{tpu_custom_call.1} parent=1 // pred_fallthru
      _
    // Predicated region
    $region34: #{tpu_custom_call.1} parent=1 // pred_check
      _
    $region35: #{tpu_custom_call.1} parent=1 // pred_check_branch
      %54 = sbr.rel (0) target = $region37
    $region36: #{tpu_custom_call.1} parent=1 // pred_region
      _
    $region37: #{tpu_custom_call.1} parent=1 // pred_fallthru
      _
    // Predicated region
    $region38: #{tpu_custom_call.1} parent=1 // pred_check
      _
    $region39: #{tpu_custom_call.1} parent=1 // pred_check_branch
      %56 = sbr.rel (0) target = $region41
    $region40: #{tpu_custom_call.1} parent=1 // pred_region
      %57 = dma.done [#allocation3], 4096
    $region41: #{tpu_custom_call.1} parent=1 // pred_fallthru
      _
    // Predicated region
    $region42: #{tpu_custom_call.1} parent=1 // pred_check
      _
    $region43: #{tpu_custom_call.1} parent=1 // pred_check_branch
      %59 = sbr.rel (0) target = $region45
    $region44: #{tpu_custom_call.1} parent=1 // pred_region
      %60 = dma.done [#allocation6], 8192
    $region45: #{tpu_custom_call.1} parent=1 // pred_fallthru
      _
    %v61 = vld [vmem:[%s0] sm:$0xff]
    %v62 = vld [vmem:[%s0 + $0x8] sm:$0xff]
    %v63 = vld [vmem:[%s1] sm:$0xff]
    %v64 = vld [vmem:[%s1 + $0x8] sm:$0xff]
    %v65 = vld [vmem:[%s1 + $0x10] sm:$0xff]
    %v66 = vld [vmem:[%s1 + $0x18] sm:$0xff]
    %v67 = vld [vmem:[%s1 + $0x20] sm:$0xff]
    %v68 = vld [vmem:[%s1 + $0x28] sm:$0xff]
    %v69 = vld [vmem:[%s1 + $0x30] sm:$0xff]
    %v70 = vld [vmem:[%s1 + $0x38] sm:$0xff]
    %v71 = vld [vmem:[%s1 + $0x40] sm:$0xff]
    %v72 = vld [vmem:[%s1 + $0x48] sm:$0xff]
    %v73 = vld [vmem:[%s1 + $0x50] sm:$0xff]
    %v74 = vld [vmem:[%s1 + $0x58] sm:$0xff]
    %v75 = vld [vmem:[%s1 + $0x60] sm:$0xff]
    %v76 = vld [vmem:[%s1 + $0x68] sm:$0xff]
    %v77 = vld [vmem:[%s1 + $0x70] sm:$0xff]
    %v78 = vld [vmem:[%s1 + $0x78] sm:$0xff]
    %v79 = vld [vmem:[%s2] sm:$0x1]
    %v81 = vlaneseq
    %v82 = vshrl.u32 %v81, 7
    %v83 = vsub.s32 0, %v82
    %v84 = vrot.slane %v79, %v83
    %86 = vmatprep.subr.mxu0 0.0
    %87 = vmatpush1.msra.mxu0 %v63
    %88 = vmatprep.subr.mxu0 0.0
    %89 = vmatpush1.msra.mxu0 %v64
    %90 = vmatprep.subr.mxu0 0.0
    %91 = vmatpush1.msra.mxu0 %v65
    %92 = vmatprep.subr.mxu0 0.0
    %93 = vmatpush1.msra.mxu0 %v66
    %94 = vmatprep.subr.mxu0 0.0
    %95 = vmatpush1.msra.mxu0 %v67
    %96 = vmatprep.subr.mxu0 0.0
    %97 = vmatpush1.msra.mxu0 %v68
    %98 = vmatprep.subr.mxu0 0.0
    %99 = vmatpush1.msra.mxu0 %v69
    %100 = vmatprep.subr.mxu0 0.0
    %101 = vmatpush1.msra.mxu0 %v70
    %102 = vmatprep.subr.mxu0 0.0
    %103 = vmatpush1.msra.mxu0 %v71
    %104 = vmatprep.subr.mxu0 0.0
    %105 = vmatpush1.msra.mxu0 %v72
    %106 = vmatprep.subr.mxu0 0.0
    %107 = vmatpush1.msra.mxu0 %v73
    %108 = vmatprep.subr.mxu0 0.0
    %109 = vmatpush1.msra.mxu0 %v74
    %110 = vmatprep.subr.mxu0 0.0
    %111 = vmatpush1.msra.mxu0 %v75
    %112 = vmatprep.subr.mxu0 0.0
    %113 = vmatpush1.msra.mxu0 %v76
    %114 = vmatprep.subr.mxu0 0.0
    %115 = vmatpush1.msra.mxu0 %v77
    %116 = vmatprep.subr.mxu0 0.0
    %117 = vmatpush1.msra.mxu0 %v78
    %118 = vmatprep.subr.mxu0 0.0
    %119 = vmatpush1.msra.mxu0 0.0
    %120 = vmatprep.subr.mxu0 0.0
    %121 = vmatpush1.msra.mxu0 0.0
    %122 = vmatprep.subr.mxu0 0.0
    %123 = vmatpush1.msra.mxu0 0.0
    %124 = vmatprep.subr.mxu0 0.0
    %125 = vmatpush1.msra.mxu0 0.0
    %126 = vmatprep.subr.mxu0 0.0
    %127 = vmatpush1.msra.mxu0 0.0
    %128 = vmatprep.subr.mxu0 0.0
    %129 = vmatpush1.msra.mxu0 0.0
    %130 = vmatprep.subr.mxu0 0.0
    %131 = vmatpush1.msra.mxu0 0.0
    %132 = vmatprep.subr.mxu0 0.0
    %133 = vmatpush1.msra.mxu0 0.0
    %134 = vmatprep.subr.mxu0 0.0
    %135 = vmatpush1.msra.mxu0 0.0
    %136 = vmatprep.subr.mxu0 0.0
    %137 = vmatpush1.msra.mxu0 0.0
    %138 = vmatprep.subr.mxu0 0.0
    %139 = vmatpush1.msra.mxu0 0.0
    %140 = vmatprep.subr.mxu0 0.0
    %141 = vmatpush1.msra.mxu0 0.0
    %142 = vmatprep.subr.mxu0 0.0
    %143 = vmatpush1.msra.mxu0 0.0
    %144 = vmatprep.subr.mxu0 0.0
    %145 = vmatpush1.msra.mxu0 0.0
    %146 = vmatprep.subr.mxu0 0.0
    %147 = vmatpush1.msra.mxu0 0.0
    %148 = vmatprep.subr.mxu0 0.0
    %149 = vmatpush1.msra.mxu0 0.0
    %150 = vmatprep.mubr.f32.mxu0 0.0
    %151 = vmatmul.mubr.f32.gmra.mrb[0].mxu0 %v61
    %v152 = vpop.f32.mrb[0].mxu0
    %v153 = vadd.f32 %v84, %v152
    %v154 = vpop.f32.mrb[0].mxu0
    %155 = vmatprep.mubr.f32.mxu0 0.0
    %156 = vmatmul.mubr.f32.gmra.mrb[0].mxu0 %v62
    %v157 = vpop.f32.mrb[0].mxu0
    %v158 = vadd.f32 %v84, %v157
    %v159 = vpop.f32.mrb[0].mxu0
    %160 = vdwg.mxu0
    %v161 = vmax.f32 %v153, 0.0
    %v162 = vmax.f32 %v158, 0.0
    %v163 = vld [vmem:[%s3] sm:$0xff]
    %v164 = vld [vmem:[%s3 + $0x8] sm:$0xff]
    %v165 = vld [vmem:[%s3 + $0x10] sm:$0xff]
    %v166 = vld [vmem:[%s3 + $0x18] sm:$0xff]
    %v167 = vld [vmem:[%s3 + $0x20] sm:$0xff]
    %v168 = vld [vmem:[%s3 + $0x28] sm:$0xff]
    %v169 = vld [vmem:[%s3 + $0x30] sm:$0xff]
    %v170 = vld [vmem:[%s3 + $0x38] sm:$0xff]
    %v171 = vld [vmem:[%s4] sm:$0x1]
    %v173 = vlaneseq
    %v174 = vshrl.u32 %v173, 7
    %v175 = vsub.s32 0, %v174
    %v176 = vrot.slane %v171, %v175
    %vm178 = vcmask 523264
    %v180 = vsel %vm178, %v161, 0
    %v183 = vsel %vm178, %v162, 0
    %185 = vmatprep.subr.mxu0 0.0
    %186 = vmatpush1.msra.mxu0 %v163
    %187 = vmatprep.subr.mxu0 0.0
    %188 = vmatpush1.msra.mxu0 %v164
    %189 = vmatprep.subr.mxu0 0.0
    %190 = vmatpush1.msra.mxu0 %v165
    %191 = vmatprep.subr.mxu0 0.0
    %192 = vmatpush1.msra.mxu0 %v166
    %193 = vmatprep.subr.mxu0 0.0
    %194 = vmatpush1.msra.mxu0 %v167
    %195 = vmatprep.subr.mxu0 0.0
    %196 = vmatpush1.msra.mxu0 %v168
    %197 = vmatprep.subr.mxu0 0.0
    %198 = vmatpush1.msra.mxu0 %v169
    %199 = vmatprep.subr.mxu0 0.0
    %200 = vmatpush1.msra.mxu0 %v170
    %201 = vmatprep.subr.mxu0 0.0
    %202 = vmatpush1.msra.mxu0 0.0
    %203 = vmatprep.subr.mxu0 0.0
    %204 = vmatpush1.msra.mxu0 0.0
    %205 = vmatprep.subr.mxu0 0.0
    %206 = vmatpush1.msra.mxu0 0.0
    %207 = vmatprep.subr.mxu0 0.0
    %208 = vmatpush1.msra.mxu0 0.0
    %209 = vmatprep.subr.mxu0 0.0
    %210 = vmatpush1.msra.mxu0 0.0
    %211 = vmatprep.subr.mxu0 0.0
    %212 = vmatpush1.msra.mxu0 0.0
    %213 = vmatprep.subr.mxu0 0.0
    %214 = vmatpush1.msra.mxu0 0.0
    %215 = vmatprep.subr.mxu0 0.0
    %216 = vmatpush1.msra.mxu0 0.0
    %217 = vmatprep.subr.mxu0 0.0
    %218 = vmatpush1.msra.mxu0 0.0
    %219 = vmatprep.subr.mxu0 0.0
    %220 = vmatpush1.msra.mxu0 0.0
    %221 = vmatprep.subr.mxu0 0.0
    %222 = vmatpush1.msra.mxu0 0.0
    %223 = vmatprep.subr.mxu0 0.0
    %224 = vmatpush1.msra.mxu0 0.0
    %225 = vmatprep.subr.mxu0 0.0
    %226 = vmatpush1.msra.mxu0 0.0
    %227 = vmatprep.subr.mxu0 0.0
    %228 = vmatpush1.msra.mxu0 0.0
    %229 = vmatprep.subr.mxu0 0.0
    %230 = vmatpush1.msra.mxu0 0.0
    %231 = vmatprep.subr.mxu0 0.0
    %232 = vmatpush1.msra.mxu0 0.0
    %233 = vmatprep.subr.mxu0 0.0
    %234 = vmatpush1.msra.mxu0 0.0
    %235 = vmatprep.subr.mxu0 0.0
    %236 = vmatpush1.msra.mxu0 0.0
    %237 = vmatprep.subr.mxu0 0.0
    %238 = vmatpush1.msra.mxu0 0.0
    %239 = vmatprep.subr.mxu0 0.0
    %240 = vmatpush1.msra.mxu0 0.0
    %241 = vmatprep.subr.mxu0 0.0
    %242 = vmatpush1.msra.mxu0 0.0
    %243 = vmatprep.subr.mxu0 0.0
    %244 = vmatpush1.msra.mxu0 0.0
    %245 = vmatprep.subr.mxu0 0.0
    %246 = vmatpush1.msra.mxu0 0.0
    %247 = vmatprep.subr.mxu0 0.0
    %248 = vmatpush1.msra.mxu0 0.0
    %249 = vmatprep.mubr.f32.mxu0 0.0
    %250 = vmatmul.mubr.f32.gmra.mrb[0].mxu0 %v180
    %v251 = vpop.f32.mrb[0].mxu0
    %v252 = vadd.f32 %v176, %v251
    %v253 = vpop.f32.mrb[0].mxu0
    %254 = vmatprep.mubr.f32.mxu0 0.0
    %255 = vmatmul.mubr.f32.gmra.mrb[0].mxu0 %v183
    %v256 = vpop.f32.mrb[0].mxu0
    %v257 = vadd.f32 %v176, %v256
    %v258 = vpop.f32.mrb[0].mxu0
    %259 = vdwg.mxu0
    %v260 = vmax.f32 %v252, 0.0
    %v261 = vmax.f32 %v257, 0.0
    %v262 = vld [vmem:[#allocation2] sm:$0xff]
    %v263 = vld [vmem:[#allocation2 + $0x8] sm:$0xff]
    %v264 = vld [vmem:[#allocation2 + $0x10] sm:$0xff]
    %v265 = vld [vmem:[#allocation2 + $0x18] sm:$0xff]
    %v266 = vld [vmem:[#allocation2 + $0x20] sm:$0xff]
    %v267 = vld [vmem:[#allocation2 + $0x28] sm:$0xff]
    %v268 = vld [vmem:[#allocation2 + $0x30] sm:$0xff]
    %v269 = vld [vmem:[#allocation2 + $0x38] sm:$0xff]
    %v270 = vld [vmem:[#allocation2 + $0x40] sm:$0xff]
    %v271 = vld [vmem:[#allocation2 + $0x48] sm:$0xff]
    %v272 = vld [vmem:[#allocation2 + $0x50] sm:$0xff]
    %v273 = vld [vmem:[#allocation2 + $0x58] sm:$0xff]
    %v274 = vld [vmem:[#allocation2 + $0x60] sm:$0xff]
    %v275 = vld [vmem:[#allocation2 + $0x68] sm:$0xff]
    %v276 = vld [vmem:[#allocation2 + $0x70] sm:$0xff]
    %v277 = vld [vmem:[#allocation2 + $0x78] sm:$0xff]
    %v278 = vld [vmem:[#allocation2 + $0x80] sm:$0xff]
    %v279 = vld [vmem:[#allocation2 + $0x88] sm:$0xff]
    %v280 = vld [vmem:[#allocation2 + $0x90] sm:$0xff]
    %v281 = vld [vmem:[#allocation2 + $0x98] sm:$0xff]
    %v282 = vld [vmem:[#allocation2 + $0xa0] sm:$0xff]
    %v283 = vld [vmem:[#allocation2 + $0xa8] sm:$0xff]
    %v284 = vld [vmem:[#allocation2 + $0xb0] sm:$0xff]
    %v285 = vld [vmem:[#allocation2 + $0xb8] sm:$0xff]
    %v286 = vld [vmem:[#allocation2 + $0xc0] sm:$0xff]
    %v287 = vld [vmem:[#allocation2 + $0xc8] sm:$0xff]
    %v288 = vld [vmem:[#allocation2 + $0xd0] sm:$0xff]
    %v289 = vld [vmem:[#allocation2 + $0xd8] sm:$0xff]
    %v290 = vld [vmem:[#allocation2 + $0xe0] sm:$0xff]
    %v291 = vld [vmem:[#allocation2 + $0xe8] sm:$0xff]
    %v292 = vld [vmem:[#allocation2 + $0xf0] sm:$0xff]
    %v293 = vld [vmem:[#allocation2 + $0xf8] sm:$0xff]
    %v294 = vld [vmem:[%s6] sm:$0x3]
    %v296 = vlaneseq
    %v297 = vshrl.u32 %v296, 7
    %v298 = vsub.s32 0, %v297
    %v299 = vrot.slane %v294, %v298
    %v300 = vlaneseq
    %v301 = vshrl.u32 %v300, 7
    %v302 = vsub.s32 1, %v301
    %v303 = vrot.slane %v294, %v302
    %306 = vmatprep.subr.mxu0 %v263
    %307 = vmatpush1.msra.mxu0 %v262
    %308 = vmatprep.subr.mxu0 %v265
    %309 = vmatpush1.msra.mxu0 %v264
    %310 = vmatprep.subr.mxu0 %v267
    %311 = vmatpush1.msra.mxu0 %v266
    %312 = vmatprep.subr.mxu0 %v269
    %313 = vmatpush1.msra.mxu0 %v268
    %314 = vmatprep.subr.mxu0 %v271
    %315 = vmatpush1.msra.mxu0 %v270
    %316 = vmatprep.subr.mxu0 %v273
    %317 = vmatpush1.msra.mxu0 %v272
    %318 = vmatprep.subr.mxu0 %v275
    %319 = vmatpush1.msra.mxu0 %v274
    %320 = vmatprep.subr.mxu0 %v277
    %321 = vmatpush1.msra.mxu0 %v276
    %322 = vmatprep.subr.mxu0 %v279
    %323 = vmatpush1.msra.mxu0 %v278
    %324 = vmatprep.subr.mxu0 %v281
    %325 = vmatpush1.msra.mxu0 %v280
    %326 = vmatprep.subr.mxu0 %v283
    %327 = vmatpush1.msra.mxu0 %v282
    %328 = vmatprep.subr.mxu0 %v285
    %329 = vmatpush1.msra.mxu0 %v284
    %330 = vmatprep.subr.mxu0 %v287
    %331 = vmatpush1.msra.mxu0 %v286
    %332 = vmatprep.subr.mxu0 %v289
    %333 = vmatpush1.msra.mxu0 %v288
    %334 = vmatprep.subr.mxu0 %v291
    %335 = vmatpush1.msra.mxu0 %v290
    %336 = vmatprep.subr.mxu0 %v293
    %337 = vmatpush1.msra.mxu0 %v292
    %338 = vmatprep.subr.mxu0 0.0
    %339 = vmatpush1.msra.mxu0 0.0
    %340 = vmatprep.subr.mxu0 0.0
    %341 = vmatpush1.msra.mxu0 0.0
    %342 = vmatprep.subr.mxu0 0.0
    %343 = vmatpush1.msra.mxu0 0.0
    %344 = vmatprep.subr.mxu0 0.0
    %345 = vmatpush1.msra.mxu0 0.0
    %346 = vmatprep.subr.mxu0 0.0
    %347 = vmatpush1.msra.mxu0 0.0
    %348 = vmatprep.subr.mxu0 0.0
    %349 = vmatpush1.msra.mxu0 0.0
    %350 = vmatprep.subr.mxu0 0.0
    %351 = vmatpush1.msra.mxu0 0.0
    %352 = vmatprep.subr.mxu0 0.0
    %353 = vmatpush1.msra.mxu0 0.0
    %354 = vmatprep.subr.mxu0 0.0
    %355 = vmatpush1.msra.mxu0 0.0
    %356 = vmatprep.subr.mxu0 0.0
    %357 = vmatpush1.msra.mxu0 0.0
    %358 = vmatprep.subr.mxu0 0.0
    %359 = vmatpush1.msra.mxu0 0.0
    %360 = vmatprep.subr.mxu0 0.0
    %361 = vmatpush1.msra.mxu0 0.0
    %362 = vmatprep.subr.mxu0 0.0
    %363 = vmatpush1.msra.mxu0 0.0
    %364 = vmatprep.subr.mxu0 0.0
    %365 = vmatpush1.msra.mxu0 0.0
    %366 = vmatprep.subr.mxu0 0.0
    %367 = vmatpush1.msra.mxu0 0.0
    %368 = vmatprep.subr.mxu0 0.0
    %369 = vmatpush1.msra.mxu0 0.0
    %370 = vmatprep.mubr.f32.mxu0 0.0
    %371 = vmatmul.mubr.f32.gmra.mrb[0].mxu0 %v260
    %v372 = vpop.f32.mrb[0].mxu0
    %v373 = vadd.f32 %v299, %v372
    %v374 = vpop.f32.mrb[0].mxu0
    %v375 = vadd.f32 %v303, %v374
    %376 = vmatprep.mubr.f32.mxu0 0.0
    %377 = vmatmul.mubr.f32.gmra.mrb[0].mxu0 %v261
    %v378 = vpop.f32.mrb[0].mxu0
    %v379 = vadd.f32 %v299, %v378
    %v380 = vpop.f32.mrb[0].mxu0
    %v381 = vadd.f32 %v303, %v380
    %382 = vdwg.mxu0
    %v383 = vmax.f32 %v373, 0.0
    %v384 = vmax.f32 %v375, 0.0
    %v385 = vmax.f32 %v379, 0.0
    %v386 = vmax.f32 %v381, 0.0
    %v387 = vld [vmem:[#allocation5] sm:$0xff]
    %v388 = vld [vmem:[#allocation5 + $0x8] sm:$0xff]
    %v389 = vld [vmem:[#allocation5 + $0x10] sm:$0xff]
    %v390 = vld [vmem:[#allocation5 + $0x18] sm:$0xff]
    %v391 = vld [vmem:[#allocation5 + $0x20] sm:$0xff]
    %v392 = vld [vmem:[#allocation5 + $0x28] sm:$0xff]
    %v393 = vld [vmem:[#allocation5 + $0x30] sm:$0xff]
    %v394 = vld [vmem:[#allocation5 + $0x38] sm:$0xff]
    %v395 = vld [vmem:[#allocation5 + $0x40] sm:$0xff]
    %v396 = vld [vmem:[#allocation5 + $0x48] sm:$0xff]
    %v397 = vld [vmem:[#allocation5 + $0x50] sm:$0xff]
    %v398 = vld [vmem:[#allocation5 + $0x58] sm:$0xff]
    %v399 = vld [vmem:[#allocation5 + $0x60] sm:$0xff]
    %v400 = vld [vmem:[#allocation5 + $0x68] sm:$0xff]
    %v401 = vld [vmem:[#allocation5 + $0x70] sm:$0xff]
    %v402 = vld [vmem:[#allocation5 + $0x78] sm:$0xff]
    %v403 = vld [vmem:[#allocation5 + $0x80] sm:$0xff]
    %v404 = vld [vmem:[#allocation5 + $0x88] sm:$0xff]
    %v405 = vld [vmem:[#allocation5 + $0x90] sm:$0xff]
    %v406 = vld [vmem:[#allocation5 + $0x98] sm:$0xff]
    %v407 = vld [vmem:[#allocation5 + $0xa0] sm:$0xff]
    %v408 = vld [vmem:[#allocation5 + $0xa8] sm:$0xff]
    %v409 = vld [vmem:[#allocation5 + $0xb0] sm:$0xff]
    %v410 = vld [vmem:[#allocation5 + $0xb8] sm:$0xff]
    %v411 = vld [vmem:[#allocation5 + $0xc0] sm:$0xff]
    %v412 = vld [vmem:[#allocation5 + $0xc8] sm:$0xff]
    %v413 = vld [vmem:[#allocation5 + $0xd0] sm:$0xff]
    %v414 = vld [vmem:[#allocation5 + $0xd8] sm:$0xff]
    %v415 = vld [vmem:[#allocation5 + $0xe0] sm:$0xff]
    %v416 = vld [vmem:[#allocation5 + $0xe8] sm:$0xff]
    %v417 = vld [vmem:[#allocation5 + $0xf0] sm:$0xff]
    %v418 = vld [vmem:[#allocation5 + $0xf8] sm:$0xff]
    %v419 = vld [vmem:[#allocation5 + $0x100] sm:$0xff]
    %v420 = vld [vmem:[#allocation5 + $0x108] sm:$0xff]
    %v421 = vld [vmem:[#allocation5 + $0x110] sm:$0xff]
    %v422 = vld [vmem:[#allocation5 + $0x118] sm:$0xff]
    %v423 = vld [vmem:[#allocation5 + $0x120] sm:$0xff]
    %v424 = vld [vmem:[#allocation5 + $0x128] sm:$0xff]
    %v425 = vld [vmem:[#allocation5 + $0x130] sm:$0xff]
    %v426 = vld [vmem:[#allocation5 + $0x138] sm:$0xff]
    %v427 = vld [vmem:[#allocation5 + $0x140] sm:$0xff]
    %v428 = vld [vmem:[#allocation5 + $0x148] sm:$0xff]
    %v429 = vld [vmem:[#allocation5 + $0x150] sm:$0xff]
    %v430 = vld [vmem:[#allocation5 + $0x158] sm:$0xff]
    %v431 = vld [vmem:[#allocation5 + $0x160] sm:$0xff]
    %v432 = vld [vmem:[#allocation5 + $0x168] sm:$0xff]
    %v433 = vld [vmem:[#allocation5 + $0x170] sm:$0xff]
    %v434 = vld [vmem:[#allocation5 + $0x178] sm:$0xff]
    %v435 = vld [vmem:[#allocation5 + $0x180] sm:$0xff]
    %v436 = vld [vmem:[#allocation5 + $0x188] sm:$0xff]
    %v437 = vld [vmem:[#allocation5 + $0x190] sm:$0xff]
    %v438 = vld [vmem:[#allocation5 + $0x198] sm:$0xff]
    %v439 = vld [vmem:[#allocation5 + $0x1a0] sm:$0xff]
    %v440 = vld [vmem:[#allocation5 + $0x1a8] sm:$0xff]
    %v441 = vld [vmem:[#allocation5 + $0x1b0] sm:$0xff]
    %v442 = vld [vmem:[#allocation5 + $0x1b8] sm:$0xff]
    %v443 = vld [vmem:[#allocation5 + $0x1c0] sm:$0xff]
    %v444 = vld [vmem:[#allocation5 + $0x1c8] sm:$0xff]
    %v445 = vld [vmem:[#allocation5 + $0x1d0] sm:$0xff]
    %v446 = vld [vmem:[#allocation5 + $0x1d8] sm:$0xff]
    %v447 = vld [vmem:[#allocation5 + $0x1e0] sm:$0xff]
    %v448 = vld [vmem:[#allocation5 + $0x1e8] sm:$0xff]
    %v449 = vld [vmem:[#allocation5 + $0x1f0] sm:$0xff]
    %v450 = vld [vmem:[#allocation5 + $0x1f8] sm:$0xff]
    %v451 = vld [vmem:[%s8] sm:$0x3]
    %v453 = vlaneseq
    %v454 = vshrl.u32 %v453, 7
    %v455 = vsub.s32 0, %v454
    %v456 = vrot.slane %v451, %v455
    %v457 = vlaneseq
    %v458 = vshrl.u32 %v457, 7
    %v459 = vsub.s32 1, %v458
    %v460 = vrot.slane %v451, %v459
    %463 = vmatprep.subr.mxu0 %v388
    %464 = vmatpush1.msra.mxu0 %v387
    %465 = vmatprep.subr.mxu0 %v390
    %466 = vmatpush1.msra.mxu0 %v389
    %467 = vmatprep.subr.mxu0 %v392
    %468 = vmatpush1.msra.mxu0 %v391
    %469 = vmatprep.subr.mxu0 %v394
    %470 = vmatpush1.msra.mxu0 %v393
    %471 = vmatprep.subr.mxu0 %v396
    %472 = vmatpush1.msra.mxu0 %v395
    %473 = vmatprep.subr.mxu0 %v398
    %474 = vmatpush1.msra.mxu0 %v397
    %475 = vmatprep.subr.mxu0 %v400
    %476 = vmatpush1.msra.mxu0 %v399
    %477 = vmatprep.subr.mxu0 %v402
    %478 = vmatpush1.msra.mxu0 %v401
    %479 = vmatprep.subr.mxu0 %v404
    %480 = vmatpush1.msra.mxu0 %v403
    %481 = vmatprep.subr.mxu0 %v406
    %482 = vmatpush1.msra.mxu0 %v405
    %483 = vmatprep.subr.mxu0 %v408
    %484 = vmatpush1.msra.mxu0 %v407
    %485 = vmatprep.subr.mxu0 %v410
    %486 = vmatpush1.msra.mxu0 %v409
    %487 = vmatprep.subr.mxu0 %v412
    %488 = vmatpush1.msra.mxu0 %v411
    %489 = vmatprep.subr.mxu0 %v414
    %490 = vmatpush1.msra.mxu0 %v413
    %491 = vmatprep.subr.mxu0 %v416
    %492 = vmatpush1.msra.mxu0 %v415
    %493 = vmatprep.subr.mxu0 %v418
    %494 = vmatpush1.msra.mxu0 %v417
    %495 = vmatprep.subr.mxu0 %v420
    %496 = vmatpush1.msra.mxu0 %v419
    %497 = vmatprep.subr.mxu0 %v422
    %498 = vmatpush1.msra.mxu0 %v421
    %499 = vmatprep.subr.mxu0 %v424
    %500 = vmatpush1.msra.mxu0 %v423
    %501 = vmatprep.subr.mxu0 %v426
    %502 = vmatpush1.msra.mxu0 %v425
    %503 = vmatprep.subr.mxu0 %v428
    %504 = vmatpush1.msra.mxu0 %v427
    %505 = vmatprep.subr.mxu0 %v430
    %506 = vmatpush1.msra.mxu0 %v429
    %507 = vmatprep.subr.mxu0 %v432
    %508 = vmatpush1.msra.mxu0 %v431
    %509 = vmatprep.subr.mxu0 %v434
    %510 = vmatpush1.msra.mxu0 %v433
    %511 = vmatprep.subr.mxu0 %v436
    %512 = vmatpush1.msra.mxu0 %v435
    %513 = vmatprep.subr.mxu0 %v438
    %514 = vmatpush1.msra.mxu0 %v437
    %515 = vmatprep.subr.mxu0 %v440
    %516 = vmatpush1.msra.mxu0 %v439
    %517 = vmatprep.subr.mxu0 %v442
    %518 = vmatpush1.msra.mxu0 %v441
    %519 = vmatprep.subr.mxu0 %v444
    %520 = vmatpush1.msra.mxu0 %v443
    %521 = vmatprep.subr.mxu0 %v446
    %522 = vmatpush1.msra.mxu0 %v445
    %523 = vmatprep.subr.mxu0 %v448
    %524 = vmatpush1.msra.mxu0 %v447
    %525 = vmatprep.subr.mxu0 %v450
    %526 = vmatpush1.msra.mxu0 %v449
    %527 = vmatprep.mubr.f32.mxu0 %v384
    %528 = vmatmul.mubr.f32.gmra.mrb[0].mxu0 %v383
    %v529 = vpop.f32.mrb[0].mxu0
    %v530 = vadd.f32 %v456, %v529
    %v531 = vpop.f32.mrb[0].mxu0
    %v532 = vadd.f32 %v460, %v531
    %533 = vmatprep.mubr.f32.mxu0 %v386
    %534 = vmatmul.mubr.f32.gmra.mrb[0].mxu0 %v385
    %v535 = vpop.f32.mrb[0].mxu0
    %v536 = vadd.f32 %v456, %v535
    %v537 = vpop.f32.mrb[0].mxu0
    %v538 = vadd.f32 %v460, %v537
    %539 = vdwg.mxu0
    %540 = vst [vmem:[#allocation7] sm:$0xff] %v530
    %541 = vst [vmem:[#allocation7 + $0x8] sm:$0xff] %v532
    %542 = vst [vmem:[#allocation7 + $0x10] sm:$0xff] %v536
    %543 = vst [vmem:[#allocation7 + $0x18] sm:$0xff] %v538
    // Predicated region
    $region46: #{tpu_custom_call.1} parent=1 // pred_check
      _
    $region47: #{tpu_custom_call.1} parent=1 // pred_check_branch
      %545 = sbr.rel (0) target = $region49
    $region48: #{tpu_custom_call.1} parent=1 // pred_region
      %s547 = ssub.s32 512, 512
      %548 = vsyncadd [#allocation4], %s547
      %s549 = sshll.u32 [#allocation7], 4
      %s550 = int_to_ptr.vmem [resolvable:$true] %s549
      %555 = dma.vmem_to_hbm [thread:$0]  %s550, 512, %s9, [#allocation4], 256, 256, 16
    $region49: #{tpu_custom_call.1} parent=1 // pred_fallthru
      _
    // Predicated region
    $region50: #{tpu_custom_call.1} parent=1 // pred_check
      _
    $region51: #{tpu_custom_call.1} parent=1 // pred_check_branch
      %557 = sbr.rel (0) target = $region53
    $region52: #{tpu_custom_call.1} parent=1 // pred_region
      %558 = dma.done [#allocation4], 512
    $region53: #{tpu_custom_call.1} parent=1 // pred_fallthru
      _
    %559 = vsyncpa [#allocation3], 1
    %560 = vsyncpa [#allocation6], 1
    %561 = vsyncpa [#allocation4], 1

</llo_original>
